<compile_context>
chip_gen: v7x
topology: tpu7x:2x2x1
jax: 0.10.0
libtpu: 0.0.40
codegen_flags: <defaults>
</compile_context>

<pallas_src>
import functools

import jax
import jax.numpy as jnp
from jax.experimental import pallas as pl
from jax.experimental.pallas import tpu as pltpu

LATENT_SIZE = 32          # stand-in for opt.latent_size
NEG_SLOPE = 0.2           # LeakyReLU slope
ROW_ALIGN = 16            # bf16 output sublane packing -> batch tiles multiple of 16


def _leaky_relu(x):
    return jnp.where(x > 0, x, NEG_SLOPE * x)


def _round_up(x, m):
    return ((x + m - 1) // m) * m


def _nearest_upsample_matrix(s):
    """(s*s, 4*s*s) 0/1 matrix implementing 2x nearest-neighbor upsampling of an
    s x s image stored as a row-major flat vector (matches F.interpolate scale=2)."""
    d = 2 * s
    dst = jnp.arange(d * d)
    row, col = dst // d, dst % d
    src = (row // 2) * s + (col // 2)
    return (jnp.arange(s * s)[:, None] == src[None, :]).astype(jnp.float32)


def _detect_hw():
    """Per-generation tile cap / VMEM limit / bf16-epilogue selection."""
    kind = ""
    try:
        kind = jax.devices()[0].device_kind.lower()
    except Exception:
        pass
    if "v5" in kind:
        # default scoped VMEM (16 MiB) is too small for 512-row stage-3 tiles;
        # raise it (physical VMEM is 128 MiB).  No bf16 EUP/VPU -> f32 tanh.
        return dict(tile_cap=512, split=False, vmem_limit=64 << 20, bf16_tanh=False)
    if "v6" in kind:
        # 128 MiB physical VMEM: bigger tiles (fewer grid steps) + bf16 epilogue.
        return dict(tile_cap=1024, split=False, vmem_limit=64 << 20, bf16_tanh=True)
    if "v7" in kind:
        # 64 MiB VMEM/TC: keep tiles <= 512 but split the batch so both TCs work.
        return dict(tile_cap=512, split=True, vmem_limit=None, bf16_tanh=True)
    # unknown chip: conservative defaults (matches previously-validated config).
    return dict(tile_cap=512, split=False, vmem_limit=None, bf16_tanh=False)


_HW = _detect_hw()


# ---------------------------------------------------------------------------
# Kernels (one per stage; each only sees the weights it actually needs)
# ---------------------------------------------------------------------------

def _stage1_kernel(z_ref, w1_ref, b1_ref, scal_ref, out_ref):
    cw, cb = scal_ref[0], scal_ref[1]
    h8 = _leaky_relu(
        jnp.dot(z_ref[...], w1_ref[...], preferred_element_type=jnp.float32)
        + b1_ref[...])
    # out is a 128-wide lane-dense slab; wrapper slices the first 64 columns.
    out_ref[...] = jnp.tanh(cw * h8 + cb).astype(out_ref.dtype)


def _stage2_kernel(z_ref, w1_ref, b1_ref, wu2_ref, bu2_ref, scal_ref, out_ref,
                   *, bf16_tanh):
    acw, acb, oma = scal_ref[0], scal_ref[1], scal_ref[2]   # alpha*cw, alpha*cb, 1-alpha
    h8 = _leaky_relu(
        jnp.dot(z_ref[...], w1_ref[...], preferred_element_type=jnp.float32)
        + b1_ref[...])
    # fused [conv∘linear_8_to_16 | upsample(conv(img8))] in one MXU dot
    y = jnp.dot(h8.astype(jnp.bfloat16), wu2_ref[...],
                preferred_element_type=jnp.float32) + bu2_ref[...]
    lin, up16 = y[:, :256], y[:, 256:]
    blend = up16 * oma + acw * _leaky_relu(lin) + acb
    if bf16_tanh:
        blend = blend.astype(jnp.bfloat16)
    out_ref[...] = jnp.tanh(blend).astype(out_ref.dtype)


def _stage3_kernel(z_ref, w1_ref, b1_ref, w2_ref, b2_ref, wu3_ref, bu3_ref,
                   scal_ref, out_ref, *, bf16_tanh):
    acw, acb, oma = scal_ref[0], scal_ref[1], scal_ref[2]
    h8 = _leaky_relu(
        jnp.dot(z_ref[...], w1_ref[...], preferred_element_type=jnp.float32)
        + b1_ref[...])
    # w2/b2 already have the conv-on-img8 affine folded in (K padded to 128)
    h16 = _leaky_relu(
        jnp.dot(h8.astype(jnp.bfloat16), w2_ref[...],
                preferred_element_type=jnp.float32) + b2_ref[...])
    # fused [conv∘linear_16_to_32 | upsample(conv(img16))] in one MXU dot
    y = jnp.dot(h16.astype(jnp.bfloat16), wu3_ref[...],
                preferred_element_type=jnp.float32) + bu3_ref[...]
    lin, up32 = y[:, :1024], y[:, 1024:]
    blend = up32 * oma + acw * _leaky_relu(lin) + acb
    if bf16_tanh:
        blend = blend.astype(jnp.bfloat16)
    out_ref[...] = jnp.tanh(blend).astype(out_ref.dtype)


# ---------------------------------------------------------------------------
# Parameter init + one-time kernel-side weight preparation
# ---------------------------------------------------------------------------

def init_params(key, latent_size=LATENT_SIZE):
    """Deterministic parameter init (shapes match the PyTorch module)."""
    ks = jax.random.split(key, 6)

    def lin(kw, kb, fan_in, fan_out):
        bound = 1.0 / jnp.sqrt(fan_in)
        w = jax.random.uniform(kw, (fan_in, fan_out), jnp.float32, -bound, bound)
        b = jax.random.uniform(kb, (1, fan_out), jnp.float32, -bound, bound)
        return w, b

    w1, b1 = lin(ks[0], ks[1], latent_size, 64)      # code2image
    w2, b2 = lin(ks[2], ks[3], 64, 256)              # linear_8_to_16
    w3, b3 = lin(ks[4], ks[5], 256, 1024)            # linear_16_to_32
    conv_w = jnp.float32(0.7)                        # Conv2d(1,1,1) weight (scalar)
    conv_b = jnp.float32(-0.1)                       # Conv2d(1,1,1) bias   (scalar)
    return dict(w1=w1, b1=b1, w2=w2, b2=b2, w3=w3, b3=b3,
                conv_w=conv_w, conv_b=conv_b)


def prepare_generator0(params, stage):
    """One-time weight prep per stage: conv folding, W|U fusion, bf16 cast, padding."""
    cw = jnp.asarray(params["conv_w"], jnp.float32)
    cb = jnp.asarray(params["conv_b"], jnp.float32)
    w1 = jnp.asarray(params["w1"], jnp.float32)
    b1 = jnp.asarray(params["b1"], jnp.float32)

    prep = {"conv_w": cw, "conv_b": cb}

    # lane-dense h8: pad w1/b1 to 128 output lanes for every stage
    # (padded columns of h8 are leaky_relu(0 + 0) == 0, so K-padded rows of the
    #  downstream matmuls contribute nothing).
    prep["w1"] = jnp.pad(w1, ((0, 0), (0, 64))).astype(jnp.bfloat16)   # (latent, 128)
    prep["b1"] = jnp.pad(b1, ((0, 0), (0, 64)))                        # (1, 128)

    if stage == 1:
        return prep

    w2 = jnp.asarray(params["w2"], jnp.float32)
    b2 = jnp.asarray(params["b2"], jnp.float32)
    # (cw*h8 + cb) @ W  ==  h8 @ (cw*W) + cb*colsum(W)
    w2_eff = cw * w2
    b2_eff = b2 + cb * jnp.sum(w2, axis=0, keepdims=True)

    if stage == 2:
        u2 = _nearest_upsample_matrix(8)                    # (64, 256), colsum == 1
        wu2 = jnp.concatenate([w2_eff, cw * u2], axis=1)    # (64, 512)
        wu2 = jnp.pad(wu2, ((0, 64), (0, 0)))               # K: 64 -> 128 (zero rows)
        prep["wu2"] = wu2.astype(jnp.bfloat16)
        prep["bu2"] = jnp.concatenate(
            [b2_eff, cb * jnp.ones((1, 256), jnp.float32)], axis=1)
        return prep

    # stage == 3
    prep["w2"] = jnp.pad(w2_eff, ((0, 64), (0, 0))).astype(jnp.bfloat16)  # (128, 256)
    prep["b2"] = b2_eff
    w3 = jnp.asarray(params["w3"], jnp.float32)
    b3 = jnp.asarray(params["b3"], jnp.float32)
    u3 = _nearest_upsample_matrix(16)                       # (256, 1024), colsum == 1
    prep["wu3"] = jnp.concatenate([cw * w3, cw * u3], axis=1).astype(jnp.bfloat16)
    prep["bu3"] = jnp.concatenate(
        [b3 + cb * jnp.sum(w3, axis=0, keepdims=True),
         cb * jnp.ones((1, 1024), jnp.float32)], axis=1)
    return prep


# ---------------------------------------------------------------------------
# Forward
# ---------------------------------------------------------------------------

@functools.partial(jax.jit, static_argnames=("stage",))
def generator0_forward(z, prep, alpha=0.0, stage=3):
    batch = z.shape[0]
    z = z.reshape(batch, -1).astype(jnp.bfloat16)      # bf16 z: half the per-tile DMA
    latent = z.shape[1]

    cw, cb = prep["conv_w"], prep["conv_b"]
    alpha = jnp.asarray(alpha, jnp.float32)
    if stage == 1:
        scalars = jnp.stack([cw, cb])                              # SMEM: [cw, cb]
    else:
        # alpha folded into the conv affine: blend = up*(1-a) + (a*cw)*leaky + a*cb
        scalars = jnp.stack([alpha * cw, alpha * cb, 1.0 - alpha])  # [acw, acb, oma]

    # batch grid: weights stay VMEM-resident, batch tiles are pipelined / parallel
    cap = _HW["tile_cap"]
    if _HW["split"] and batch > ROW_ALIGN:
        # v7x: force >= 2 grid steps so both TensorCores get a batch shard
        tile_b = min(cap, _round_up(-(-batch // 2), ROW_ALIGN))
    else:
        tile_b = min(cap, _round_up(batch, ROW_ALIGN))
    b_pad = _round_up(batch, tile_b)
    if b_pad != batch:
        z = jnp.pad(z, ((0, b_pad - batch), (0, 0)))
    grid = (b_pad // tile_b,)

    if stage == 1:
        kernel, out_dim, side = _stage1_kernel, 128, 8
        weights = (prep["w1"], prep["b1"])
    elif stage == 2:
        kernel = functools.partial(_stage2_kernel, bf16_tanh=_HW["bf16_tanh"])
        out_dim, side = 256, 16
        weights = (prep["w1"], prep["b1"], prep["wu2"], prep["bu2"])
    elif stage == 3:
        kernel = functools.partial(_stage3_kernel, bf16_tanh=_HW["bf16_tanh"])
        out_dim, side = 1024, 32
        weights = (prep["w1"], prep["b1"], prep["w2"], prep["b2"],
                   prep["wu3"], prep["bu3"])
    else:
        raise ValueError("stage must be 1, 2 or 3")

    in_specs = (
        [pl.BlockSpec((tile_b, latent), lambda i: (i, 0))]                  # z: tiled
        + [pl.BlockSpec(w.shape, lambda i: (0, 0)) for w in weights]        # resident
        + [pl.BlockSpec(memory_space=pltpu.MemorySpace.SMEM)]               # scalars
    )

    cp_kwargs = dict(dimension_semantics=("parallel",))
    if _HW["vmem_limit"] is not None:
        cp_kwargs["vmem_limit_bytes"] = _HW["vmem_limit"]

    out_flat = pl.pallas_call(
        kernel,
        out_shape=jax.ShapeDtypeStruct((b_pad, out_dim), jnp.bfloat16),  # bf16 writeback
        grid=grid,
        in_specs=in_specs,
        out_specs=pl.BlockSpec((tile_b, out_dim), lambda i: (i, 0)),
        compiler_params=pltpu.CompilerParams(**cp_kwargs),
    )(z, *weights, scalars)

    # back to NCHW f32, matching torch.tanh(combine.view(b, 1, side, side))
    return (out_flat[:batch, : side * side]
            .astype(jnp.float32)
            .reshape(batch, 1, side, side))


# ---------------------------------------------------------------------------
# Pure-JAX f32 reference (mirrors the PyTorch forward exactly) for validation
# ---------------------------------------------------------------------------

def generator0_reference(z, params, alpha=0.0, stage=3):
    batch = z.shape[0]
    z = z.reshape(batch, -1).astype(jnp.float32)
    cw, cb = params["conv_w"], params["conv_b"]

    def conv(x):
        return cw * x + cb

    img8 = conv(_leaky_relu(z @ params["w1"] + params["b1"]))
    if stage == 1:
        return jnp.tanh(img8).reshape(batch, 1, 8, 8)
    img16 = conv(_leaky_relu(img8 @ params["w2"] + params["b2"]))
    if stage == 2:
        up16 = img8 @ _nearest_upsample_matrix(8)
        comb = up16 * (1.0 - alpha) + img16 * alpha
        return jnp.tanh(comb).reshape(batch, 1, 16, 16)
    img32 = conv(_leaky_relu(img16 @ params["w3"] + params["b3"]))
    up32 = img16 @ _nearest_upsample_matrix(16)
    comb = up32 * (1.0 - alpha) + img32 * alpha
    return jnp.tanh(comb).reshape(batch, 1, 32, 32)


if __name__ == "__main__":
    key = jax.random.PRNGKey(0)
    k_param, k_z = jax.random.split(key)

    params = init_params(k_param)
    batch = 8
    z = jax.random.normal(k_z, (batch, LATENT_SIZE), jnp.float32)

    for stage, alpha in ((1, 0.0), (2, 0.5), (3, 0.5)):
        prep = prepare_generator0(params, stage)
        out = generator0_forward(z, prep, alpha, stage=stage)
        jax.block_until_ready(out)

        side = {1: 8, 2: 16, 3: 32}[stage]
        assert out.shape == (batch, 1, side, side)
        assert bool(jnp.all(jnp.isfinite(out)))

        ref = generator0_reference(z, params, alpha, stage)
        max_err = float(jnp.max(jnp.abs(out - ref)))
        assert max_err < 0.1, f"stage {stage}: max abs err {max_err}"

    print("KERNEL_OK")
</pallas_src>

<mosaic_0001>
module attributes {stable_mosaic.version = 11 : i64} {
  func.func @_stage1_kernel(%arg0: i32, %arg1: memref<16x32xbf16, #tpu.memory_space<vmem>>, %arg2: memref<32x128xbf16, #tpu.memory_space<vmem>>, %arg3: memref<1x128xf32, #tpu.memory_space<vmem>>, %arg4: memref<2xf32, #tpu.memory_space<smem>>, %arg5: memref<16x128xbf16, #tpu.memory_space<vmem>>) attributes {dimension_semantics = [#tpu.dimension_semantics<parallel>], iteration_bounds = array<i64: 1>, scalar_prefetch = 0 : i64, scratch_operands = 0 : i64, tpu.core_type = #tpu.core_type<tc>, window_params = [{transform_indices = @transform_0, window_bounds = array<i64: 16, 32>}, {pipeline_mode = #tpu.pipeline_mode<synchronous>, transform_indices = @transform_1, window_bounds = array<i64: 32, 128>}, {pipeline_mode = #tpu.pipeline_mode<synchronous>, transform_indices = @transform_2, window_bounds = array<i64: 1, 128>}, {transform_indices = @transform_3, window_bounds = array<i64: 2>}, {transform_indices = @transform_4, window_bounds = array<i64: 16, 128>}]} {
    %c0 = arith.constant 0 : index
    %0 = memref.load %arg4[%c0] : memref<2xf32, #tpu.memory_space<smem>>
    %c1 = arith.constant 1 : index
    %1 = memref.load %arg4[%c1] : memref<2xf32, #tpu.memory_space<smem>>
    %c0_0 = arith.constant 0 : index
    %c0_1 = arith.constant 0 : index
    %2 = vector.load %arg1[%c0_0, %c0_1] : memref<16x32xbf16, #tpu.memory_space<vmem>>, vector<16x32xbf16>
    %c0_2 = arith.constant 0 : index
    %c0_3 = arith.constant 0 : index
    %3 = vector.load %arg2[%c0_2, %c0_3] : memref<32x128xbf16, #tpu.memory_space<vmem>>, vector<32x128xbf16>
    %cst = arith.constant dense<0.000000e+00> : vector<16x128xf32>
    %4 = tpu.matmul %2, %3, %cst {dimension_numbers = #tpu.dot_dimension_numbers<[1], [0], [0], [1], [0, 0, 1, 1], [], []>} : vector<16x32xbf16>, vector<32x128xbf16>, vector<16x128xf32> -> vector<16x128xf32>
    %c0_4 = arith.constant 0 : index
    %c0_5 = arith.constant 0 : index
    %5 = vector.load %arg3[%c0_4, %c0_5] : memref<1x128xf32, #tpu.memory_space<vmem>>, vector<1x128xf32>
    %6 = vector.broadcast %5 : vector<1x128xf32> to vector<16x128xf32>
    %7 = arith.addf %4, %6 : vector<16x128xf32>
    %cst_6 = arith.constant 0.000000e+00 : f32
    %8 = vector.broadcast %cst_6 : f32 to vector<16x128xf32>
    %9 = arith.cmpf ogt, %7, %8 : vector<16x128xf32>
    %cst_7 = arith.constant 2.000000e-01 : f32
    %10 = vector.broadcast %cst_7 : f32 to vector<16x128xf32>
    %11 = arith.mulf %10, %7 : vector<16x128xf32>
    %12 = arith.select %9, %7, %11 : vector<16x128xi1>, vector<16x128xf32>
    %13 = vector.broadcast %0 : f32 to vector<16x128xf32>
    %14 = arith.mulf %13, %12 : vector<16x128xf32>
    %15 = vector.broadcast %1 : f32 to vector<16x128xf32>
    %16 = arith.addf %14, %15 : vector<16x128xf32>
    %17 = math.tanh %16 : vector<16x128xf32>
    %18 = arith.truncf %17 : vector<16x128xf32> to vector<16x128xbf16>
    %c0_8 = arith.constant 0 : index
    %c0_9 = arith.constant 0 : index
    %19 = vector.load %arg5[%c0_8, %c0_9] : memref<16x128xbf16, #tpu.memory_space<vmem>>, vector<16x128xbf16>
    tpu.vector_store %arg5[%c0_8, %c0_9], %18 {strides = array<i32>} : memref<16x128xbf16, #tpu.memory_space<vmem>>, vector<16x128xbf16>,
    return
  }
  func.func @transform_0(%arg0: i32) -> (i32, i32) {
    %c0_i32 = arith.constant 0 : i32
    %c0_i32_0 = arith.constant 0 : i32
    return %arg0, %c0_i32 : i32, i32
  }
  func.func @transform_1(%arg0: i32) -> (i32, i32) {
    %c0_i32 = arith.constant 0 : i32
    %c0_i32_0 = arith.constant 0 : i32
    %c0_i32_1 = arith.constant 0 : i32
    return %c0_i32, %c0_i32_0 : i32, i32
  }
  func.func @transform_2(%arg0: i32) -> (i32, i32) {
    %c0_i32 = arith.constant 0 : i32
    %c0_i32_0 = arith.constant 0 : i32
    %c0_i32_1 = arith.constant 0 : i32
    return %c0_i32, %c0_i32_0 : i32, i32
  }
  func.func @transform_3(%arg0: i32) -> i32 {
    %c0_i32 = arith.constant 0 : i32
    %c0_i32_0 = arith.constant 0 : i32
    return %c0_i32 : i32
  }
  func.func @transform_4(%arg0: i32) -> (i32, i32) {
    %c0_i32 = arith.constant 0 : i32
    %c0_i32_0 = arith.constant 0 : i32
    return %arg0, %c0_i32 : i32, i32
  }
}

</mosaic_0001>

<llo_original>
// kernel: generator0_forward.1
$region0: #{generator0_forward.1}
  #allocation0 [shape = 'u32[]', space=smem, size = 0x4, offset = 0x4, fixed_abs, tag = 'smem constant byte address 0x4 - core index']
  #allocation1 [shape = 'u32[144,128]{1,0:T(1,128)}', space=vmem, size = 0x12000, scoped, tag = 'internal scratch']
  %s0 = inlined_call_operand.vmem [shape: bf16[16,32], index: 0, kind: input, shape index: {}]
  %s1 = inlined_call_operand.vmem [shape: bf16[32,128], index: 1, kind: input, shape index: {}]
  %s2 = inlined_call_operand.vmem [shape: f32[1,128], index: 2, kind: input, shape index: {}]
  %s3 = inlined_call_operand.vmem [shape: f32[2], index: 3, kind: input, shape index: {}]
  %s4 = inlined_call_operand.vmem [shape: bf16[16,128], index: 4, kind: output, shape index: {}]
  %s5 = sld [smem:[#allocation0]]
  $region30: #{generator0_forward.1} parent=0
    _
  %s7 = ssub.s32 1, %s5
  %s8 = scalar_select 0, %s7, %s5
  $region1: #{generator0_forward.1} parent=0
    #allocation2 [shape = 'u8[512]{0}', space=smem, size = 0x200, scoped, tag = 'input window, operand 3, single buffered']
    #allocation3 [shape = 's32[1]{0}', space=sflag, size = 0x4, scoped, tag = 'scoped memory for generator0_forward.1']
    %9 = vsyncpa [#allocation3], 0
    // Predicated region
    $region2: #{generator0_forward.1} parent=1 // pred_check
      _
    $region3: #{generator0_forward.1} parent=1 // pred_check_branch
      %11 = sbr.rel (0) target = $region5
    $region4: #{generator0_forward.1} parent=1 // pred_region
      _
    $region5: #{generator0_forward.1} parent=1 // pred_fallthru
      _
    // Predicated region
    $region6: #{generator0_forward.1} parent=1 // pred_check
      _
    $region7: #{generator0_forward.1} parent=1 // pred_check_branch
      %13 = sbr.rel (0) target = $region9
    $region8: #{generator0_forward.1} parent=1 // pred_region
      _
    $region9: #{generator0_forward.1} parent=1 // pred_fallthru
      _
    // Predicated region
    $region10: #{generator0_forward.1} parent=1 // pred_check
      _
    $region11: #{generator0_forward.1} parent=1 // pred_check_branch
      %15 = sbr.rel (0) target = $region13
    $region12: #{generator0_forward.1} parent=1 // pred_region
      _
    $region13: #{generator0_forward.1} parent=1 // pred_fallthru
      _
    // Predicated region
    $region14: #{generator0_forward.1} parent=1 // pred_check
      _
    $region15: #{generator0_forward.1} parent=1 // pred_check_branch
      %17 = sbr.rel (0) target = $region17
    $region16: #{generator0_forward.1} parent=1 // pred_region
      %s19 = ssub.s32 16, 16
      %20 = vsyncadd [#allocation3], %s19
      %s22 = sshll.u32 %s3, 4
      %s23 = int_to_ptr.vmem [resolvable:$true] %s22
      %25 = dma.vmem_to_smem %s23, 16, [#allocation2], [#allocation3]
    $region17: #{generator0_forward.1} parent=1 // pred_fallthru
      _
    // Predicated region
    $region18: #{generator0_forward.1} parent=1 // pred_check
      _
    $region19: #{generator0_forward.1} parent=1 // pred_check_branch
      %27 = sbr.rel (0) target = $region21
    $region20: #{generator0_forward.1} parent=1 // pred_region
      %28 = dma.done [#allocation3], 16
    $region21: #{generator0_forward.1} parent=1 // pred_fallthru
      _
    %29 = sfence
    %s31 = sld [smem:[#allocation2]]
    %s32 = sld [smem:[#allocation2 + $0x1]]
    %v33 = vld [vmem:[%s0] sm:$0xf]
    %v34 = vld [vmem:[%s0 + $0x4] sm:$0xf]
    %v35 = vld [vmem:[%s1] sm:$0xf]
    %v36 = vld [vmem:[%s1 + $0x4] sm:$0xf]
    %v37 = vld [vmem:[%s1 + $0x8] sm:$0xf]
    %v38 = vld [vmem:[%s1 + $0xc] sm:$0xf]
    %v39 = vld [vmem:[%s2] sm:$0x1]
    %v41 = vlaneseq
    %v42 = vshrl.u32 %v41, 7
    %v43 = vsub.s32 0, %v42
    %v44 = vrot.slane %v39, %v43
    %v48 = vunpack.c.l.b16 %v33
    %v49 = vunpack.c.l.b16 %v34
    %v50 = vpack.c.b16 %v49, %v48
    %v55 = vunpack.c.l.b16 %v35
    %v56 = vunpack.c.l.b16 %v36
    %v57 = vunpack.c.l.b16 %v37
    %v58 = vunpack.c.l.b16 %v38
    %v59 = vpack.c.b16 %v56, %v55
    %v60 = vpack.c.b16 %v58, %v57
    %vm63 = vcmask 261120
    %v65 = vsel %vm63, %v50, 0
    %67 = vmatprep.subr.bf16.mxu0 0
    %68 = vmatpush1.bf16.msra.mxu0 %v59
    %69 = vmatprep.subr.bf16.mxu0 0
    %70 = vmatpush1.bf16.msra.mxu0 %v60
    %71 = vmatprep.subr.bf16.mxu0 0
    %72 = vmatpush1.bf16.msra.mxu0 0
    %73 = vmatprep.subr.bf16.mxu0 0
    %74 = vmatpush1.bf16.msra.mxu0 0
    %75 = vmatprep.subr.bf16.mxu0 0
    %76 = vmatpush1.bf16.msra.mxu0 0
    %77 = vmatprep.subr.bf16.mxu0 0
    %78 = vmatpush1.bf16.msra.mxu0 0
    %79 = vmatprep.subr.bf16.mxu0 0
    %80 = vmatpush1.bf16.msra.mxu0 0
    %81 = vmatprep.subr.bf16.mxu0 0
    %82 = vmatpush1.bf16.msra.mxu0 0
    %83 = vmatprep.subr.bf16.mxu0 0
    %84 = vmatpush1.bf16.msra.mxu0 0
    %85 = vmatprep.subr.bf16.mxu0 0
    %86 = vmatpush1.bf16.msra.mxu0 0
    %87 = vmatprep.subr.bf16.mxu0 0
    %88 = vmatpush1.bf16.msra.mxu0 0
    %89 = vmatprep.subr.bf16.mxu0 0
    %90 = vmatpush1.bf16.msra.mxu0 0
    %91 = vmatprep.subr.bf16.mxu0 0
    %92 = vmatpush1.bf16.msra.mxu0 0
    %93 = vmatprep.subr.bf16.mxu0 0
    %94 = vmatpush1.bf16.msra.mxu0 0
    %95 = vmatprep.subr.bf16.mxu0 0
    %96 = vmatpush1.bf16.msra.mxu0 0
    %97 = vmatprep.subr.bf16.mxu0 0
    %98 = vmatpush1.bf16.msra.mxu0 0
    %99 = vmatprep.mubr.bf16.mxu0 0
    %100 = vmatmul.mubr.bf16.gmra.mrb[0].mxu0 %v65
    %v101 = vpop.f32.mrb[0].mxu0
    %v102 = vadd.f32 %v44, %v101
    %v103 = vpop.f32.mrb[0].mxu0
    %v104 = vpop.f32.mrb[0].mxu0
    %v105 = vadd.f32 %v44, %v104
    %v106 = vpop.f32.mrb[0].mxu0
    %107 = vdwg.mxu0
    %vm108 = vcmp.gt.f32.partialorder %v102, 0.0
    %vm109 = vcmp.gt.f32.partialorder %v105, 0.0
    %v110 = vmul.f32 %v102, 0.2
    %v111 = vmul.f32 %v105, 0.2
    %v112 = vsel %vm108, %v102, %v110
    %v113 = vsel %vm109, %v105, %v111
    %v114 = vstv %s31
    %v115 = vmul.f32 %v114, %v112
    %v116 = vmul.f32 %v114, %v113
    %v117 = vstv %s32
    %v118 = vadd.f32 %v115, %v117
    %v119 = vadd.f32 %v116, %v117
    %v120 = vtanh.pop %v118
    %v121 = vtanh.pop %v119
    %v122 = vpack.c.bf16 %v121, %v120
    %v124 = vunpack.c.l.b16 %v122
    %v125 = vunpack.c.h.b16 %v122
    %v126 = vpack.c.b16 %v124, %v124
    %v127 = vpack.c.b16 %v125, %v125
    %130 = vst [vmem:[%s4] sm:$0xf] %v126
    %131 = vst [vmem:[%s4 + $0x4] sm:$0xf] %v127
    // Predicated region
    $region22: #{generator0_forward.1} parent=1 // pred_check
      _
    $region23: #{generator0_forward.1} parent=1 // pred_check_branch
      %133 = sbr.rel (0) target = $region25
    $region24: #{generator0_forward.1} parent=1 // pred_region
      _
    $region25: #{generator0_forward.1} parent=1 // pred_fallthru
      _
    // Predicated region
    $region26: #{generator0_forward.1} parent=1 // pred_check
      _
    $region27: #{generator0_forward.1} parent=1 // pred_check_branch
      %135 = sbr.rel (0) target = $region29
    $region28: #{generator0_forward.1} parent=1 // pred_region
      _
    $region29: #{generator0_forward.1} parent=1 // pred_fallthru
      _
    %136 = vsyncpa [#allocation3], 1

</llo_original>
